<compile_context>
chip_gen: v5e
topology: v5e:2x2
jax: 0.10.0
libtpu: 0.0.40
codegen_flags: <defaults>
</compile_context>

<pallas_src>
import functools

import jax
import jax.numpy as jnp
from jax.experimental import pallas as pl
from jax.experimental.pallas import tpu as pltpu


def _round_up(x, m):
    return (x + m - 1) // m * m


# Tri-state cache: None = untested, True/False = pipeline_mode=Buffered(1) works.
_SINGLE_BUFFER_WEIGHTS_OK = None


# -----------------------------------------------------------------------------
# Kernel body
# -----------------------------------------------------------------------------
def encoder_kernel(x_ref, w1_ref, b1_ref, wh_ref, bh_ref, heads_ref, *,
                   negative_slope):
    # fc1: MXU matmul with f32 accumulation. x is cast in-kernel to the weight
    # dtype (bf16 fast path / f32 exact path); bias add stays f32.
    x = x_ref[...].astype(w1_ref.dtype)
    h = jnp.dot(x, w1_ref[...], preferred_element_type=jnp.float32) + b1_ref[...]
    # LeakyReLU as a single VPU max (valid for 0 < slope < 1).
    h = jnp.maximum(h, negative_slope * h)
    # Fused mu/logvar heads: one N = 2*lat_p matmul, one wide lane-dense store.
    heads = jnp.dot(h.astype(wh_ref.dtype), wh_ref[...],
                    preferred_element_type=jnp.float32) + bh_ref[...]
    heads_ref[...] = heads.astype(heads_ref.dtype)


# -----------------------------------------------------------------------------
# One-time weight preparation (hoisted out of the per-call path)
# -----------------------------------------------------------------------------
def prepare_encoder_params(params, *, use_bf16=True):
    """Pad to 128-lane multiples, fuse the two heads, cast matmul operands.

    Call this ONCE and reuse the result across forward calls; doing it per call
    costs more HBM traffic than the kernel itself when the batch is small.
    """
    w1, b1 = params["w1"], params["b1"]
    wmu, bmu = params["wmu"], params["bmu"]
    wlv, blv = params["wlv"], params["blv"]

    res_size, hid = w1.shape
    latent = wmu.shape[1]
    res_p = _round_up(res_size, 128)
    hid_p = _round_up(hid, 128)
    lat_p = _round_up(latent, 128)

    w_dtype = jnp.bfloat16 if use_bf16 else jnp.float32

    w1p = jnp.pad(w1, ((0, res_p - res_size), (0, hid_p - hid))).astype(w_dtype)
    b1p = jnp.pad(b1, ((0, 0), (0, hid_p - hid))).astype(jnp.float32)
    wh = jnp.concatenate(
        [jnp.pad(wmu, ((0, hid_p - hid), (0, lat_p - latent))),
         jnp.pad(wlv, ((0, hid_p - hid), (0, lat_p - latent)))],
        axis=1).astype(w_dtype)
    bh = jnp.concatenate(
        [jnp.pad(bmu, ((0, 0), (0, lat_p - latent))),
         jnp.pad(blv, ((0, 0), (0, lat_p - latent)))],
        axis=1).astype(jnp.float32)

    return {
        "w1": w1p, "b1": b1p, "wh": wh, "bh": bh,
        "res_size": res_size, "hid": hid, "latent": latent,
        "res_p": res_p, "hid_p": hid_p, "lat_p": lat_p,
    }


def _pick_tm(b_pad, res_p, hid_p, lat_p):
    """Batch tile: multiple of 8; >=2 grid steps once the batch is big enough
    (v7x has 2 TensorCores sharing the 'parallel' axis); capped so per-step
    row-tile VMEM stays well under v7x's 64 MiB / v5e's tight scoped default."""
    if b_pad <= 64:
        return b_pad
    # f32 bytes per batch row resident in VMEM:
    #   x tile (2 buffers) + h intermediate + heads intermediate + out (2 buf).
    per_row = 4 * (2 * res_p + hid_p + 6 * lat_p)
    cap = (24 * 1024 * 1024) // max(per_row, 1)
    cap = max(8, min(512, (cap // 8) * 8))
    n_steps = max(2, pl.cdiv(b_pad, cap))     # >= 2 so both v7x TCs get work
    tm = _round_up(pl.cdiv(b_pad, n_steps), 8)
    return max(8, min(tm, cap))


# -----------------------------------------------------------------------------
# Forward
# -----------------------------------------------------------------------------
def encoder_forward(res, prepared, *, negative_slope=0.2, tm=None):
    """res: [B, resSize] float32; prepared = prepare_encoder_params(...).

    Returns (mu, logvar), each [B, latent] in res.dtype.
    """
    assert 0.0 < negative_slope < 1.0, (
        "max-based LeakyReLU requires 0 < negative_slope < 1")

    B, res_size = res.shape
    assert res_size == prepared["res_size"], "resSize mismatch with prepared params"
    res_p, hid_p, lat_p = prepared["res_p"], prepared["hid_p"], prepared["lat_p"]
    latent = prepared["latent"]
    w1, b1, wh, bh = prepared["w1"], prepared["b1"], prepared["wh"], prepared["bh"]

    # Sublane-align the batch; never fall back to a whole-batch block for
    # awkward batch sizes.
    b8 = _round_up(B, 8)
    if tm is None:
        tm = _pick_tm(b8, res_p, hid_p, lat_p)
    tm = max(8, _round_up(min(int(tm), b8), 8))
    b_pad = _round_up(b8, tm)
    grid = (b_pad // tm,)

    x = res
    if (b_pad != B) or (res_p != res_size):
        x = jnp.pad(res, ((0, b_pad - B), (0, res_p - res_size)))

    # Explicit VMEM budget (v5e default scoped limit is only 16 MiB; v7x has
    # 64 MiB physical): weights (possibly double-buffered) + f32 row tiles,
    # with headroom, clamped to [16 MiB, 64 MiB].
    # TODO(synk): for very large resSize*hid (bf16 W1 block > ~12 MiB on v7x),
    # add a K ('arbitrary') grid axis with an f32 VMEM accumulator instead of
    # holding all of W1 in one block.
    w_bytes = w1.size * w1.dtype.itemsize + wh.size * wh.dtype.itemsize
    b_bytes = (b1.size + bh.size) * 4
    tile_bytes = 4 * tm * (2 * res_p + hid_p + 6 * lat_p)
    vmem_limit = int(min(64 * 1024 * 1024,
                         max(16 * 1024 * 1024,
                             2 * (2 * w_bytes + b_bytes) + 2 * tile_bytes)))

    kernel = functools.partial(encoder_kernel, negative_slope=negative_slope)
    out_shape = jax.ShapeDtypeStruct((b_pad, 2 * lat_p), res.dtype)
    out_specs = pl.BlockSpec((tm, 2 * lat_p), lambda i: (i, 0))

    def build_in_specs(single_buffer_weights):
        def wspec(shape):
            if single_buffer_weights:
                # Constant index_map -> block never changes; single-buffer it
                # to halve resident weight VMEM.
                return pl.BlockSpec(shape, lambda i: (0, 0),
                                    pipeline_mode=pl.Buffered(1))
            return pl.BlockSpec(shape, lambda i: (0, 0))
        return [
            pl.BlockSpec((tm, res_p), lambda i: (i, 0)),   # x tile (f32)
            wspec((res_p, hid_p)),                          # W1
            wspec((1, hid_p)),                              # b1
            wspec((hid_p, 2 * lat_p)),                      # [W_mu | W_logvar]
            wspec((1, 2 * lat_p)),                          # [b_mu | b_logvar]
        ]

    def run(single_buffer_weights):
        return pl.pallas_call(
            kernel,
            out_shape=out_shape,
            grid_spec=pltpu.PrefetchScalarGridSpec(
                num_scalar_prefetch=0,
                grid=grid,
                in_specs=build_in_specs(single_buffer_weights),
                out_specs=out_specs,
            ),
            compiler_params=pltpu.CompilerParams(
                dimension_semantics=("parallel",),
                vmem_limit_bytes=vmem_limit),
        )(x, w1, b1, wh, bh)

    global _SINGLE_BUFFER_WEIGHTS_OK
    if _SINGLE_BUFFER_WEIGHTS_OK is None:
        _SINGLE_BUFFER_WEIGHTS_OK = hasattr(pl, "Buffered")
    if _SINGLE_BUFFER_WEIGHTS_OK:
        try:
            heads = run(True)
        except Exception:
            # pipeline_mode=Buffered(1) not supported on this jax version /
            # backend -> fall back to default double-buffering.
            _SINGLE_BUFFER_WEIGHTS_OK = False
            heads = run(False)
    else:
        heads = run(False)

    mu = heads[:B, :latent]
    logvar = heads[:B, lat_p:lat_p + latent]
    return mu, logvar


def init_encoder_params(key, res_size, hid, latent):
    """Mirror weights_init: Linear weights ~ N(0, 0.02), biases = 0."""
    k1, k2, k3 = jax.random.split(key, 3)
    std = 0.02
    return {
        "w1": (std * jax.random.normal(k1, (res_size, hid))).astype(jnp.float32),
        "b1": jnp.zeros((1, hid), jnp.float32),
        "wmu": (std * jax.random.normal(k2, (hid, latent))).astype(jnp.float32),
        "bmu": jnp.zeros((1, latent), jnp.float32),
        "wlv": (std * jax.random.normal(k3, (hid, latent))).astype(jnp.float32),
        "blv": jnp.zeros((1, latent), jnp.float32),
    }
    # NOTE: fc2 exists in Encoder.__init__ but is unused in forward(); omitted.


if __name__ == "__main__":
    # opt = {'resSize': 256, 'netE_hid': 128, 'latent_feature_size': 128,
    #        'activate_index': 0.2}
    B, RES, HID, LAT = 16, 256, 128, 128
    slope = 0.2

    key = jax.random.PRNGKey(0)
    k_x, k_p = jax.random.split(key)
    res = jax.random.normal(k_x, (B, RES), dtype=jnp.float32)
    params = init_encoder_params(k_p, RES, HID, LAT)

    # Pure-JAX f32 reference (same math as the PyTorch module's forward()).
    h_ref = res @ params["w1"] + params["b1"]
    h_ref = jnp.where(h_ref > 0, h_ref, slope * h_ref)
    mu_ref = h_ref @ params["wmu"] + params["bmu"]
    lv_ref = h_ref @ params["wlv"] + params["blv"]

    # Exact f32 path: tight check.
    prep_f32 = prepare_encoder_params(params, use_bf16=False)
    mu32, lv32 = encoder_forward(res, prep_f32, negative_slope=slope)
    jax.block_until_ready((mu32, lv32))
    assert mu32.shape == (B, LAT) and lv32.shape == (B, LAT)
    assert jnp.allclose(mu32, mu_ref, atol=1e-5), "mu (f32) mismatch"
    assert jnp.allclose(lv32, lv_ref, atol=1e-5), "logvar (f32) mismatch"

    # Fast path: prepare bf16 weights ONCE, reuse across calls; loose check.
    prep_bf16 = prepare_encoder_params(params, use_bf16=True)
    mu, logvar = encoder_forward(res, prep_bf16, negative_slope=slope)
    jax.block_until_ready((mu, logvar))
    assert jnp.allclose(mu, mu_ref, atol=5e-3, rtol=5e-2), "mu (bf16) mismatch"
    assert jnp.allclose(logvar, lv_ref, atol=5e-3, rtol=5e-2), "logvar (bf16) mismatch"

    print("KERNEL_OK")
</pallas_src>

<mosaic_0001>
module attributes {stable_mosaic.version = 11 : i64} {
  func.func @encoder_kernel(%arg0: i32, %arg1: memref<16x256xf32, #tpu.memory_space<vmem>>, %arg2: memref<256x128xf32, #tpu.memory_space<vmem>>, %arg3: memref<1x128xf32, #tpu.memory_space<vmem>>, %arg4: memref<128x256xf32, #tpu.memory_space<vmem>>, %arg5: memref<1x256xf32, #tpu.memory_space<vmem>>, %arg6: memref<16x256xf32, #tpu.memory_space<vmem>>) attributes {dimension_semantics = [#tpu.dimension_semantics<parallel>], iteration_bounds = array<i64: 1>, scalar_prefetch = 0 : i64, scratch_operands = 0 : i64, tpu.core_type = #tpu.core_type<tc>, window_params = [{transform_indices = @transform_0, window_bounds = array<i64: 16, 256>}, {pipeline_mode = #tpu.pipeline_mode<synchronous>, transform_indices = @transform_1, window_bounds = array<i64: 256, 128>}, {pipeline_mode = #tpu.pipeline_mode<synchronous>, transform_indices = @transform_2, window_bounds = array<i64: 1, 128>}, {pipeline_mode = #tpu.pipeline_mode<synchronous>, transform_indices = @transform_3, window_bounds = array<i64: 128, 256>}, {pipeline_mode = #tpu.pipeline_mode<synchronous>, transform_indices = @transform_4, window_bounds = array<i64: 1, 256>}, {transform_indices = @transform_5, window_bounds = array<i64: 16, 256>}]} {
    %c0 = arith.constant 0 : index
    %c0_0 = arith.constant 0 : index
    %0 = vector.load %arg1[%c0, %c0_0] : memref<16x256xf32, #tpu.memory_space<vmem>>, vector<16x256xf32>
    %c0_1 = arith.constant 0 : index
    %c0_2 = arith.constant 0 : index
    %1 = vector.load %arg2[%c0_1, %c0_2] : memref<256x128xf32, #tpu.memory_space<vmem>>, vector<256x128xf32>
    %cst = arith.constant dense<0.000000e+00> : vector<16x128xf32>
    %2 = tpu.matmul %0, %1, %cst {dimension_numbers = #tpu.dot_dimension_numbers<[1], [0], [0], [1], [0, 0, 1, 1], [], []>} : vector<16x256xf32>, vector<256x128xf32>, vector<16x128xf32> -> vector<16x128xf32>
    %c0_3 = arith.constant 0 : index
    %c0_4 = arith.constant 0 : index
    %3 = vector.load %arg3[%c0_3, %c0_4] : memref<1x128xf32, #tpu.memory_space<vmem>>, vector<1x128xf32>
    %4 = vector.broadcast %3 : vector<1x128xf32> to vector<16x128xf32>
    %5 = arith.addf %2, %4 : vector<16x128xf32>
    %cst_5 = arith.constant 2.000000e-01 : f32
    %6 = vector.broadcast %cst_5 : f32 to vector<16x128xf32>
    %7 = arith.mulf %6, %5 : vector<16x128xf32>
    %8 = arith.maximumf %5, %7 : vector<16x128xf32>
    %c0_6 = arith.constant 0 : index
    %c0_7 = arith.constant 0 : index
    %9 = vector.load %arg4[%c0_6, %c0_7] : memref<128x256xf32, #tpu.memory_space<vmem>>, vector<128x256xf32>
    %cst_8 = arith.constant dense<0.000000e+00> : vector<16x256xf32>
    %10 = tpu.matmul %8, %9, %cst_8 {dimension_numbers = #tpu.dot_dimension_numbers<[1], [0], [0], [1], [0, 0, 1, 1], [], []>} : vector<16x128xf32>, vector<128x256xf32>, vector<16x256xf32> -> vector<16x256xf32>
    %c0_9 = arith.constant 0 : index
    %c0_10 = arith.constant 0 : index
    %11 = vector.load %arg5[%c0_9, %c0_10] : memref<1x256xf32, #tpu.memory_space<vmem>>, vector<1x256xf32>
    %12 = vector.broadcast %11 : vector<1x256xf32> to vector<16x256xf32>
    %13 = arith.addf %10, %12 : vector<16x256xf32>
    %c0_11 = arith.constant 0 : index
    %c0_12 = arith.constant 0 : index
    %14 = vector.load %arg6[%c0_11, %c0_12] : memref<16x256xf32, #tpu.memory_space<vmem>>, vector<16x256xf32>
    tpu.vector_store %arg6[%c0_11, %c0_12], %13 {strides = array<i32>} : memref<16x256xf32, #tpu.memory_space<vmem>>, vector<16x256xf32>,
    return
  }
  func.func @transform_0(%arg0: i32) -> (i32, i32) {
    %c0_i32 = arith.constant 0 : i32
    %c0_i32_0 = arith.constant 0 : i32
    return %arg0, %c0_i32 : i32, i32
  }
  func.func @transform_1(%arg0: i32) -> (i32, i32) {
    %c0_i32 = arith.constant 0 : i32
    %c0_i32_0 = arith.constant 0 : i32
    %c0_i32_1 = arith.constant 0 : i32
    return %c0_i32, %c0_i32_0 : i32, i32
  }
  func.func @transform_2(%arg0: i32) -> (i32, i32) {
    %c0_i32 = arith.constant 0 : i32
    %c0_i32_0 = arith.constant 0 : i32
    %c0_i32_1 = arith.constant 0 : i32
    return %c0_i32, %c0_i32_0 : i32, i32
  }
  func.func @transform_3(%arg0: i32) -> (i32, i32) {
    %c0_i32 = arith.constant 0 : i32
    %c0_i32_0 = arith.constant 0 : i32
    %c0_i32_1 = arith.constant 0 : i32
    return %c0_i32, %c0_i32_0 : i32, i32
  }
  func.func @transform_4(%arg0: i32) -> (i32, i32) {
    %c0_i32 = arith.constant 0 : i32
    %c0_i32_0 = arith.constant 0 : i32
    %c0_i32_1 = arith.constant 0 : i32
    return %c0_i32, %c0_i32_0 : i32, i32
  }
  func.func @transform_5(%arg0: i32) -> (i32, i32) {
    %c0_i32 = arith.constant 0 : i32
    %c0_i32_0 = arith.constant 0 : i32
    return %arg0, %c0_i32 : i32, i32
  }
}

module attributes {stable_mosaic.version = 11 : i64} {
  func.func @encoder_kernel(%arg0: i32, %arg1: memref<16x256xf32, #tpu.memory_space<vmem>>, %arg2: memref<256x128xf32, #tpu.memory_space<vmem>>, %arg3: memref<1x128xf32, #tpu.memory_space<vmem>>, %arg4: memref<128x256xf32, #tpu.memory_space<vmem>>, %arg5: memref<1x256xf32, #tpu.memory_space<vmem>>, %arg6: memref<16x256xf32, #tpu.memory_space<vmem>>) attributes {dimension_semantics = [#tpu.dimension_semantics<parallel>], iteration_bounds = array<i64: 1>, scalar_prefetch = 0 : i64, scratch_operands = 0 : i64, tpu.core_type = #tpu.core_type<tc>, window_params = [{transform_indices = @transform_0, window_bounds = array<i64: 16, 256>}, {pipeline_mode = #tpu.pipeline_mode<synchronous>, transform_indices = @transform_1, window_bounds = array<i64: 256, 128>}, {pipeline_mode = #tpu.pipeline_mode<synchronous>, transform_indices = @transform_2, window_bounds = array<i64: 1, 128>}, {pipeline_mode = #tpu.pipeline_mode<synchronous>, transform_indices = @transform_3, window_bounds = array<i64: 128, 256>}, {pipeline_mode = #tpu.pipeline_mode<synchronous>, transform_indices = @transform_4, window_bounds = array<i64: 1, 256>}, {transform_indices = @transform_5, window_bounds = array<i64: 16, 256>}]} {
    %c0 = arith.constant 0 : index
    %c0_0 = arith.constant 0 : index
    %0 = vector.load %arg1[%c0, %c0_0] : memref<16x256xf32, #tpu.memory_space<vmem>>, vector<16x256xf32>
    %c0_1 = arith.constant 0 : index
    %c0_2 = arith.constant 0 : index
    %1 = vector.load %arg2[%c0_1, %c0_2] : memref<256x128xf32, #tpu.memory_space<vmem>>, vector<256x128xf32>
    %cst = arith.constant dense<0.000000e+00> : vector<16x128xf32>
    %2 = tpu.matmul %0, %1, %cst {dimension_numbers = #tpu.dot_dimension_numbers<[1], [0], [0], [1], [0, 0, 1, 1], [], []>} : vector<16x256xf32>, vector<256x128xf32>, vector<16x128xf32> -> vector<16x128xf32>
    %c0_3 = arith.constant 0 : index
    %c0_4 = arith.constant 0 : index
    %3 = vector.load %arg3[%c0_3, %c0_4] : memref<1x128xf32, #tpu.memory_space<vmem>>, vector<1x128xf32>
    %4 = vector.broadcast %3 : vector<1x128xf32> to vector<16x128xf32>
    %5 = arith.addf %2, %4 : vector<16x128xf32>
    %cst_5 = arith.constant 2.000000e-01 : f32
    %6 = vector.broadcast %cst_5 : f32 to vector<16x128xf32>
    %7 = arith.mulf %6, %5 : vector<16x128xf32>
    %8 = arith.maximumf %5, %7 : vector<16x128xf32>
    %c0_6 = arith.constant 0 : index
    %c0_7 = arith.constant 0 : index
    %9 = vector.load %arg4[%c0_6, %c0_7] : memref<128x256xf32, #tpu.memory_space<vmem>>, vector<128x256xf32>
    %cst_8 = arith.constant dense<0.000000e+00> : vector<16x256xf32>
    %10 = tpu.matmul %8, %9, %cst_8 {dimension_numbers = #tpu.dot_dimension_numbers<[1], [0], [0], [1], [0, 0, 1, 1], [], []>} : vector<16x128xf32>, vector<128x256xf32>, vector<16x256xf32> -> vector<16x256xf32>
    %c0_9 = arith.constant 0 : index
    %c0_10 = arith.constant 0 : index
    %11 = vector.load %arg5[%c0_9, %c0_10] : memref<1x256xf32, #tpu.memory_space<vmem>>, vector<1x256xf32>
    %12 = vector.broadcast %11 : vector<1x256xf32> to vector<16x256xf32>
    %13 = arith.addf %10, %12 : vector<16x256xf32>
    %c0_11 = arith.constant 0 : index
    %c0_12 = arith.constant 0 : index
    %14 = vector.load %arg6[%c0_11, %c0_12] : memref<16x256xf32, #tpu.memory_space<vmem>>, vector<16x256xf32>
    tpu.vector_store %arg6[%c0_11, %c0_12], %13 {strides = array<i32>} : memref<16x256xf32, #tpu.memory_space<vmem>>, vector<16x256xf32>,
    return
  }
  func.func @transform_0(%arg0: i32) -> (i32, i32) {
    %c0_i32 = arith.constant 0 : i32
    %c0_i32_0 = arith.constant 0 : i32
    return %arg0, %c0_i32 : i32, i32
  }
  func.func @transform_1(%arg0: i32) -> (i32, i32) {
    %c0_i32 = arith.constant 0 : i32
    %c0_i32_0 = arith.constant 0 : i32
    %c0_i32_1 = arith.constant 0 : i32
    return %c0_i32, %c0_i32_0 : i32, i32
  }
  func.func @transform_2(%arg0: i32) -> (i32, i32) {
    %c0_i32 = arith.constant 0 : i32
    %c0_i32_0 = arith.constant 0 : i32
    %c0_i32_1 = arith.constant 0 : i32
    return %c0_i32, %c0_i32_0 : i32, i32
  }
  func.func @transform_3(%arg0: i32) -> (i32, i32) {
    %c0_i32 = arith.constant 0 : i32
    %c0_i32_0 = arith.constant 0 : i32
    %c0_i32_1 = arith.constant 0 : i32
    return %c0_i32, %c0_i32_0 : i32, i32
  }
  func.func @transform_4(%arg0: i32) -> (i32, i32) {
    %c0_i32 = arith.constant 0 : i32
    %c0_i32_0 = arith.constant 0 : i32
    %c0_i32_1 = arith.constant 0 : i32
    return %c0_i32, %c0_i32_0 : i32, i32
  }
  func.func @transform_5(%arg0: i32) -> (i32, i32) {
    %c0_i32 = arith.constant 0 : i32
    %c0_i32_0 = arith.constant 0 : i32
    return %arg0, %c0_i32 : i32, i32
  }
}

</mosaic_0001>

<llo_original>
// kernel: tpu_custom_call.1
$region0: #{tpu_custom_call.1}
  #allocation0 [shape = 'u32[]', space=smem, size = 0x4, offset = 0x4, fixed_abs, tag = 'smem constant byte address 0x4 - core index']
  #allocation1 [shape = 'u32[72,128]{1,0:T(1,128)}', space=vmem, size = 0x9000, scoped, tag = 'internal scratch']
  %s0 = inlined_call_operand.hbm [shape: f32[16,256], index: 0, kind: input, shape index: {}]
  %s1 = inlined_call_operand.hbm [shape: f32[256,128], index: 1, kind: input, shape index: {}]
  %s2 = inlined_call_operand.vmem [shape: f32[1,128], index: 2, kind: input, shape index: {}]
  %s3 = inlined_call_operand.hbm [shape: f32[128,256], index: 3, kind: input, shape index: {}]
  %s4 = inlined_call_operand.vmem [shape: f32[1,256], index: 4, kind: input, shape index: {}]
  %s5 = inlined_call_operand.hbm [shape: f32[16,256], index: 5, kind: output, shape index: {}]
  %s6 = sld [smem:[#allocation0]]
  $region42: #{tpu_custom_call.1} parent=0
    _
  %s8 = ssub.s32 1, %s6
  %s9 = scalar_select 0, %s8, %s6
  $region1: #{tpu_custom_call.1} parent=0
    #allocation2 [shape = 'u8[16384]{0}', space=vmem, size = 0x4000, scoped, tag = 'input window, operand 0, single buffered']
    #allocation3 [shape = 's32[1]{0}', space=sflag, size = 0x4, scoped, tag = 'scoped memory for tpu_custom_call.1']
    #allocation4 [shape = 's32[1]{0}', space=sflag, size = 0x4, scoped, tag = 'scoped memory for tpu_custom_call.1']
    #allocation5 [shape = 'u8[131072]{0}', space=vmem, size = 0x20000, scoped, tag = 'input window, operand 1, single buffered']
    #allocation6 [shape = 's32[1]{0}', space=sflag, size = 0x4, scoped, tag = 'scoped memory for tpu_custom_call.1']
    #allocation7 [shape = 'u8[131072]{0}', space=vmem, size = 0x20000, scoped, tag = 'input window, operand 3, single buffered']
    #allocation8 [shape = 'u8[16384]{0}', space=vmem, size = 0x4000, scoped, tag = 'output window, operand 0, single buffered']
    %10 = vsyncpa [#allocation3], 0
    %11 = vsyncpa [#allocation6], 0
    %12 = vsyncpa [#allocation4], 0
    // Predicated region
    $region2: #{tpu_custom_call.1} parent=1 // pred_check
      _
    $region3: #{tpu_custom_call.1} parent=1 // pred_check_branch
      %14 = sbr.rel (0) target = $region5
    $region4: #{tpu_custom_call.1} parent=1 // pred_region
      %16 = vsyncadd [#allocation3], 0
      %s17 = sshll.u32 %s0, 4
      %s18 = int_to_ptr.hbm [resolvable:$true] %s17
      %s19 = sshll.u32 [#allocation2], 4
      %s20 = int_to_ptr.vmem [resolvable:$true] %s19
      %25 = dma.hbm_to_vmem [thread:$0]  %s18, 512, %s20, [#allocation3], 256, 256, 16
    $region5: #{tpu_custom_call.1} parent=1 // pred_fallthru
      _
    // Predicated region
    $region6: #{tpu_custom_call.1} parent=1 // pred_check
      _
    $region7: #{tpu_custom_call.1} parent=1 // pred_check_branch
      %27 = sbr.rel (0) target = $region9
    $region8: #{tpu_custom_call.1} parent=1 // pred_region
      %29 = vsyncadd [#allocation6], 0
      %s30 = sshll.u32 %s1, 4
      %s31 = int_to_ptr.hbm [resolvable:$true] %s30
      %s32 = sshll.u32 [#allocation5], 4
      %s33 = int_to_ptr.vmem [resolvable:$true] %s32
      %38 = dma.hbm_to_vmem [thread:$0]  %s31, 4096, %s33, [#allocation6], 128, 128, 8
    $region9: #{tpu_custom_call.1} parent=1 // pred_fallthru
      _
    // Predicated region
    $region10: #{tpu_custom_call.1} parent=1 // pred_check
      _
    $region11: #{tpu_custom_call.1} parent=1 // pred_check_branch
      %40 = sbr.rel (0) target = $region13
    $region12: #{tpu_custom_call.1} parent=1 // pred_region
      _
    $region13: #{tpu_custom_call.1} parent=1 // pred_fallthru
      _
    // Predicated region
    $region14: #{tpu_custom_call.1} parent=1 // pred_check
      _
    $region15: #{tpu_custom_call.1} parent=1 // pred_check_branch
      %42 = sbr.rel (0) target = $region17
    $region16: #{tpu_custom_call.1} parent=1 // pred_region
      %44 = vsyncadd [#allocation6], 0
      %s45 = sshll.u32 %s3, 4
      %s46 = int_to_ptr.hbm [resolvable:$true] %s45
      %s47 = sshll.u32 [#allocation7], 4
      %s48 = int_to_ptr.vmem [resolvable:$true] %s47
      %53 = dma.hbm_to_vmem [thread:$0]  %s46, 4096, %s48, [#allocation6], 256, 256, 16
    $region17: #{tpu_custom_call.1} parent=1 // pred_fallthru
      _
    // Predicated region
    $region18: #{tpu_custom_call.1} parent=1 // pred_check
      _
    $region19: #{tpu_custom_call.1} parent=1 // pred_check_branch
      %55 = sbr.rel (0) target = $region21
    $region20: #{tpu_custom_call.1} parent=1 // pred_region
      _
    $region21: #{tpu_custom_call.1} parent=1 // pred_fallthru
      _
    // Predicated region
    $region22: #{tpu_custom_call.1} parent=1 // pred_check
      _
    $region23: #{tpu_custom_call.1} parent=1 // pred_check_branch
      %57 = sbr.rel (0) target = $region25
    $region24: #{tpu_custom_call.1} parent=1 // pred_region
      %59 = dma.done [#allocation3], 512
    $region25: #{tpu_custom_call.1} parent=1 // pred_fallthru
      _
    // Predicated region
    $region26: #{tpu_custom_call.1} parent=1 // pred_check
      _
    $region27: #{tpu_custom_call.1} parent=1 // pred_check_branch
      %61 = sbr.rel (0) target = $region29
    $region28: #{tpu_custom_call.1} parent=1 // pred_region
      %63 = dma.done [#allocation6], 4096
    $region29: #{tpu_custom_call.1} parent=1 // pred_fallthru
      _
    // Predicated region
    $region30: #{tpu_custom_call.1} parent=1 // pred_check
      _
    $region31: #{tpu_custom_call.1} parent=1 // pred_check_branch
      %65 = sbr.rel (0) target = $region33
    $region32: #{tpu_custom_call.1} parent=1 // pred_region
      %67 = dma.done [#allocation6], 4096
    $region33: #{tpu_custom_call.1} parent=1 // pred_fallthru
      _
    %v68 = vld [vmem:[#allocation2] sm:$0xff]
    %v69 = vld [vmem:[#allocation2 + $0x8] sm:$0xff]
    %v70 = vld [vmem:[#allocation2 + $0x10] sm:$0xff]
    %v71 = vld [vmem:[#allocation2 + $0x18] sm:$0xff]
    %v72 = vld [vmem:[#allocation5] sm:$0xff]
    %v73 = vld [vmem:[#allocation5 + $0x8] sm:$0xff]
    %v74 = vld [vmem:[#allocation5 + $0x10] sm:$0xff]
    %v75 = vld [vmem:[#allocation5 + $0x18] sm:$0xff]
    %v76 = vld [vmem:[#allocation5 + $0x20] sm:$0xff]
    %v77 = vld [vmem:[#allocation5 + $0x28] sm:$0xff]
    %v78 = vld [vmem:[#allocation5 + $0x30] sm:$0xff]
    %v79 = vld [vmem:[#allocation5 + $0x38] sm:$0xff]
    %v80 = vld [vmem:[#allocation5 + $0x40] sm:$0xff]
    %v81 = vld [vmem:[#allocation5 + $0x48] sm:$0xff]
    %v82 = vld [vmem:[#allocation5 + $0x50] sm:$0xff]
    %v83 = vld [vmem:[#allocation5 + $0x58] sm:$0xff]
    %v84 = vld [vmem:[#allocation5 + $0x60] sm:$0xff]
    %v85 = vld [vmem:[#allocation5 + $0x68] sm:$0xff]
    %v86 = vld [vmem:[#allocation5 + $0x70] sm:$0xff]
    %v87 = vld [vmem:[#allocation5 + $0x78] sm:$0xff]
    %v88 = vld [vmem:[#allocation5 + $0x80] sm:$0xff]
    %v89 = vld [vmem:[#allocation5 + $0x88] sm:$0xff]
    %v90 = vld [vmem:[#allocation5 + $0x90] sm:$0xff]
    %v91 = vld [vmem:[#allocation5 + $0x98] sm:$0xff]
    %v92 = vld [vmem:[#allocation5 + $0xa0] sm:$0xff]
    %v93 = vld [vmem:[#allocation5 + $0xa8] sm:$0xff]
    %v94 = vld [vmem:[#allocation5 + $0xb0] sm:$0xff]
    %v95 = vld [vmem:[#allocation5 + $0xb8] sm:$0xff]
    %v96 = vld [vmem:[#allocation5 + $0xc0] sm:$0xff]
    %v97 = vld [vmem:[#allocation5 + $0xc8] sm:$0xff]
    %v98 = vld [vmem:[#allocation5 + $0xd0] sm:$0xff]
    %v99 = vld [vmem:[#allocation5 + $0xd8] sm:$0xff]
    %v100 = vld [vmem:[#allocation5 + $0xe0] sm:$0xff]
    %v101 = vld [vmem:[#allocation5 + $0xe8] sm:$0xff]
    %v102 = vld [vmem:[#allocation5 + $0xf0] sm:$0xff]
    %v103 = vld [vmem:[#allocation5 + $0xf8] sm:$0xff]
    %v104 = vld [vmem:[%s2] sm:$0x1]
    %v106 = vperm.slane %v104, 0
    %108 = vmatpush.msra.mxu0 %v87
    %109 = vmatpush.msra.mxu0 %v86
    %110 = vmatpush.msra.mxu0 %v85
    %111 = vmatpush.msra.mxu0 %v84
    %112 = vmatpush.msra.mxu0 %v83
    %113 = vmatpush.msra.mxu0 %v82
    %114 = vmatpush.msra.mxu0 %v81
    %115 = vmatpush.msra.mxu0 %v80
    %116 = vmatpush.msra.mxu0 %v79
    %117 = vmatpush.msra.mxu0 %v78
    %118 = vmatpush.msra.mxu0 %v77
    %119 = vmatpush.msra.mxu0 %v76
    %120 = vmatpush.msra.mxu0 %v75
    %121 = vmatpush.msra.mxu0 %v74
    %122 = vmatpush.msra.mxu0 %v73
    %123 = vmatpush.msra.mxu0 %v72
    %124 = vmatmul.f32.gmra.mxu0 %v68
    %v125 = vpop.f32.mrf.mxu0
    %v126 = vadd.f32 %v106, %v125
    %127 = vmatmul.f32.gmra.mxu0 %v70
    %v128 = vpop.f32.mrf.mxu0
    %v129 = vadd.f32 %v106, %v128
    %130 = vdwg.mxu0
    %131 = vmatpush.msra.mxu0 %v103
    %132 = vmatpush.msra.mxu0 %v102
    %133 = vmatpush.msra.mxu0 %v101
    %134 = vmatpush.msra.mxu0 %v100
    %135 = vmatpush.msra.mxu0 %v99
    %136 = vmatpush.msra.mxu0 %v98
    %137 = vmatpush.msra.mxu0 %v97
    %138 = vmatpush.msra.mxu0 %v96
    %139 = vmatpush.msra.mxu0 %v95
    %140 = vmatpush.msra.mxu0 %v94
    %141 = vmatpush.msra.mxu0 %v93
    %142 = vmatpush.msra.mxu0 %v92
    %143 = vmatpush.msra.mxu0 %v91
    %144 = vmatpush.msra.mxu0 %v90
    %145 = vmatpush.msra.mxu0 %v89
    %146 = vmatpush.msra.mxu0 %v88
    %147 = vmatmul.f32.gmra.mxu0 %v69
    %v148 = vpop.f32.mrf.mxu0
    %v149 = vadd.f32 %v126, %v148
    %150 = vmatmul.f32.gmra.mxu0 %v71
    %v151 = vpop.f32.mrf.mxu0
    %v152 = vadd.f32 %v129, %v151
    %153 = vdwg.mxu0
    %v154 = vmul.f32 %v149, 0.2
    %v155 = vmul.f32 %v152, 0.2
    %v156 = vmax.f32 %v149, %v154
    %v157 = vmax.f32 %v152, %v155
    %v158 = vld [vmem:[#allocation7] sm:$0xff]
    %v159 = vld [vmem:[#allocation7 + $0x8] sm:$0xff]
    %v160 = vld [vmem:[#allocation7 + $0x10] sm:$0xff]
    %v161 = vld [vmem:[#allocation7 + $0x18] sm:$0xff]
    %v162 = vld [vmem:[#allocation7 + $0x20] sm:$0xff]
    %v163 = vld [vmem:[#allocation7 + $0x28] sm:$0xff]
    %v164 = vld [vmem:[#allocation7 + $0x30] sm:$0xff]
    %v165 = vld [vmem:[#allocation7 + $0x38] sm:$0xff]
    %v166 = vld [vmem:[#allocation7 + $0x40] sm:$0xff]
    %v167 = vld [vmem:[#allocation7 + $0x48] sm:$0xff]
    %v168 = vld [vmem:[#allocation7 + $0x50] sm:$0xff]
    %v169 = vld [vmem:[#allocation7 + $0x58] sm:$0xff]
    %v170 = vld [vmem:[#allocation7 + $0x60] sm:$0xff]
    %v171 = vld [vmem:[#allocation7 + $0x68] sm:$0xff]
    %v172 = vld [vmem:[#allocation7 + $0x70] sm:$0xff]
    %v173 = vld [vmem:[#allocation7 + $0x78] sm:$0xff]
    %v174 = vld [vmem:[#allocation7 + $0x80] sm:$0xff]
    %v175 = vld [vmem:[#allocation7 + $0x88] sm:$0xff]
    %v176 = vld [vmem:[#allocation7 + $0x90] sm:$0xff]
    %v177 = vld [vmem:[#allocation7 + $0x98] sm:$0xff]
    %v178 = vld [vmem:[#allocation7 + $0xa0] sm:$0xff]
    %v179 = vld [vmem:[#allocation7 + $0xa8] sm:$0xff]
    %v180 = vld [vmem:[#allocation7 + $0xb0] sm:$0xff]
    %v181 = vld [vmem:[#allocation7 + $0xb8] sm:$0xff]
    %v182 = vld [vmem:[#allocation7 + $0xc0] sm:$0xff]
    %v183 = vld [vmem:[#allocation7 + $0xc8] sm:$0xff]
    %v184 = vld [vmem:[#allocation7 + $0xd0] sm:$0xff]
    %v185 = vld [vmem:[#allocation7 + $0xd8] sm:$0xff]
    %v186 = vld [vmem:[#allocation7 + $0xe0] sm:$0xff]
    %v187 = vld [vmem:[#allocation7 + $0xe8] sm:$0xff]
    %v188 = vld [vmem:[#allocation7 + $0xf0] sm:$0xff]
    %v189 = vld [vmem:[#allocation7 + $0xf8] sm:$0xff]
    %v190 = vld [vmem:[%s4] sm:$0x3]
    %v192 = vperm.slane %v190, 0
    %v193 = vperm.slane %v190, 1
    %196 = vmatpush.msra.mxu0 %v188
    %197 = vmatpush.msra.mxu0 %v186
    %198 = vmatpush.msra.mxu0 %v184
    %199 = vmatpush.msra.mxu0 %v182
    %200 = vmatpush.msra.mxu0 %v180
    %201 = vmatpush.msra.mxu0 %v178
    %202 = vmatpush.msra.mxu0 %v176
    %203 = vmatpush.msra.mxu0 %v174
    %204 = vmatpush.msra.mxu0 %v172
    %205 = vmatpush.msra.mxu0 %v170
    %206 = vmatpush.msra.mxu0 %v168
    %207 = vmatpush.msra.mxu0 %v166
    %208 = vmatpush.msra.mxu0 %v164
    %209 = vmatpush.msra.mxu0 %v162
    %210 = vmatpush.msra.mxu0 %v160
    %211 = vmatpush.msra.mxu0 %v158
    %212 = vmatmul.f32.gmra.mxu0 %v156
    %v213 = vpop.f32.mrf.mxu0
    %v214 = vadd.f32 %v192, %v213
    %215 = vmatmul.f32.gmra.mxu0 %v157
    %v216 = vpop.f32.mrf.mxu0
    %v217 = vadd.f32 %v192, %v216
    %218 = vdwg.mxu0
    %219 = vmatpush.msra.mxu0 %v189
    %220 = vmatpush.msra.mxu0 %v187
    %221 = vmatpush.msra.mxu0 %v185
    %222 = vmatpush.msra.mxu0 %v183
    %223 = vmatpush.msra.mxu0 %v181
    %224 = vmatpush.msra.mxu0 %v179
    %225 = vmatpush.msra.mxu0 %v177
    %226 = vmatpush.msra.mxu0 %v175
    %227 = vmatpush.msra.mxu0 %v173
    %228 = vmatpush.msra.mxu0 %v171
    %229 = vmatpush.msra.mxu0 %v169
    %230 = vmatpush.msra.mxu0 %v167
    %231 = vmatpush.msra.mxu0 %v165
    %232 = vmatpush.msra.mxu0 %v163
    %233 = vmatpush.msra.mxu0 %v161
    %234 = vmatpush.msra.mxu0 %v159
    %235 = vmatmul.f32.gmra.mxu0 %v156
    %v236 = vpop.f32.mrf.mxu0
    %v237 = vadd.f32 %v193, %v236
    %238 = vmatmul.f32.gmra.mxu0 %v157
    %v239 = vpop.f32.mrf.mxu0
    %v240 = vadd.f32 %v193, %v239
    %241 = vdwg.mxu0
    %242 = vst [vmem:[#allocation8] sm:$0xff] %v214
    %243 = vst [vmem:[#allocation8 + $0x8] sm:$0xff] %v237
    %244 = vst [vmem:[#allocation8 + $0x10] sm:$0xff] %v217
    %245 = vst [vmem:[#allocation8 + $0x18] sm:$0xff] %v240
    // Predicated region
    $region34: #{tpu_custom_call.1} parent=1 // pred_check
      _
    $region35: #{tpu_custom_call.1} parent=1 // pred_check_branch
      %247 = sbr.rel (0) target = $region37
    $region36: #{tpu_custom_call.1} parent=1 // pred_region
      %249 = vsyncadd [#allocation4], 0
      %s250 = sshll.u32 [#allocation8], 4
      %s251 = int_to_ptr.vmem [resolvable:$true] %s250
      %s252 = sshll.u32 %s5, 4
      %s253 = int_to_ptr.hbm [resolvable:$true] %s252
      %258 = dma.vmem_to_hbm [thread:$0]  %s251, 512, %s253, [#allocation4], 256, 256, 16
    $region37: #{tpu_custom_call.1} parent=1 // pred_fallthru
      _
    // Predicated region
    $region38: #{tpu_custom_call.1} parent=1 // pred_check
      _
    $region39: #{tpu_custom_call.1} parent=1 // pred_check_branch
      %260 = sbr.rel (0) target = $region41
    $region40: #{tpu_custom_call.1} parent=1 // pred_region
      %262 = dma.done [#allocation4], 512
    $region41: #{tpu_custom_call.1} parent=1 // pred_fallthru
      _
    %263 = vsyncpa [#allocation3], 1
    %264 = vsyncpa [#allocation6], 1
    %265 = vsyncpa [#allocation4], 1

// kernel: tpu_custom_call.1
$region0: #{tpu_custom_call.1}
  #allocation0 [shape = 'u32[]', space=smem, size = 0x4, offset = 0x4, fixed_abs, tag = 'smem constant byte address 0x4 - core index']
  #allocation1 [shape = 'u32[72,128]{1,0:T(1,128)}', space=vmem, size = 0x9000, scoped, tag = 'internal scratch']
  %s0 = inlined_call_operand.hbm [shape: f32[16,256], index: 0, kind: input, shape index: {}]
  %s1 = inlined_call_operand.hbm [shape: f32[256,128], index: 1, kind: input, shape index: {}]
  %s2 = inlined_call_operand.vmem [shape: f32[1,128], index: 2, kind: input, shape index: {}]
  %s3 = inlined_call_operand.hbm [shape: f32[128,256], index: 3, kind: input, shape index: {}]
  %s4 = inlined_call_operand.vmem [shape: f32[1,256], index: 4, kind: input, shape index: {}]
  %s5 = inlined_call_operand.hbm [shape: f32[16,256], index: 5, kind: output, shape index: {}]
  %s6 = sld [smem:[#allocation0]]
  $region42: #{tpu_custom_call.1} parent=0
    _
  %s8 = ssub.s32 1, %s6
  %s9 = scalar_select 0, %s8, %s6
  $region1: #{tpu_custom_call.1} parent=0
    #allocation2 [shape = 'u8[16384]{0}', space=vmem, size = 0x4000, scoped, tag = 'input window, operand 0, single buffered']
    #allocation3 [shape = 's32[1]{0}', space=sflag, size = 0x4, scoped, tag = 'scoped memory for tpu_custom_call.1']
    #allocation4 [shape = 's32[1]{0}', space=sflag, size = 0x4, scoped, tag = 'scoped memory for tpu_custom_call.1']
    #allocation5 [shape = 'u8[131072]{0}', space=vmem, size = 0x20000, scoped, tag = 'input window, operand 1, single buffered']
    #allocation6 [shape = 's32[1]{0}', space=sflag, size = 0x4, scoped, tag = 'scoped memory for tpu_custom_call.1']
    #allocation7 [shape = 'u8[131072]{0}', space=vmem, size = 0x20000, scoped, tag = 'input window, operand 3, single buffered']
    #allocation8 [shape = 'u8[16384]{0}', space=vmem, size = 0x4000, scoped, tag = 'output window, operand 0, single buffered']
    %10 = vsyncpa [#allocation3], 0
    %11 = vsyncpa [#allocation6], 0
    %12 = vsyncpa [#allocation4], 0
    // Predicated region
    $region2: #{tpu_custom_call.1} parent=1 // pred_check
      _
    $region3: #{tpu_custom_call.1} parent=1 // pred_check_branch
      %14 = sbr.rel (0) target = $region5
    $region4: #{tpu_custom_call.1} parent=1 // pred_region
      %16 = vsyncadd [#allocation3], 0
      %s17 = sshll.u32 %s0, 4
      %s18 = int_to_ptr.hbm [resolvable:$true] %s17
      %s19 = sshll.u32 [#allocation2], 4
      %s20 = int_to_ptr.vmem [resolvable:$true] %s19
      %25 = dma.hbm_to_vmem [thread:$0]  %s18, 512, %s20, [#allocation3], 256, 256, 16
    $region5: #{tpu_custom_call.1} parent=1 // pred_fallthru
      _
    // Predicated region
    $region6: #{tpu_custom_call.1} parent=1 // pred_check
      _
    $region7: #{tpu_custom_call.1} parent=1 // pred_check_branch
      %27 = sbr.rel (0) target = $region9
    $region8: #{tpu_custom_call.1} parent=1 // pred_region
      %29 = vsyncadd [#allocation6], 0
      %s30 = sshll.u32 %s1, 4
      %s31 = int_to_ptr.hbm [resolvable:$true] %s30
      %s32 = sshll.u32 [#allocation5], 4
      %s33 = int_to_ptr.vmem [resolvable:$true] %s32
      %38 = dma.hbm_to_vmem [thread:$0]  %s31, 4096, %s33, [#allocation6], 128, 128, 8
    $region9: #{tpu_custom_call.1} parent=1 // pred_fallthru
      _
    // Predicated region
    $region10: #{tpu_custom_call.1} parent=1 // pred_check
      _
    $region11: #{tpu_custom_call.1} parent=1 // pred_check_branch
      %40 = sbr.rel (0) target = $region13
    $region12: #{tpu_custom_call.1} parent=1 // pred_region
      _
    $region13: #{tpu_custom_call.1} parent=1 // pred_fallthru
      _
    // Predicated region
    $region14: #{tpu_custom_call.1} parent=1 // pred_check
      _
    $region15: #{tpu_custom_call.1} parent=1 // pred_check_branch
      %42 = sbr.rel (0) target = $region17
    $region16: #{tpu_custom_call.1} parent=1 // pred_region
      %44 = vsyncadd [#allocation6], 0
      %s45 = sshll.u32 %s3, 4
      %s46 = int_to_ptr.hbm [resolvable:$true] %s45
      %s47 = sshll.u32 [#allocation7], 4
      %s48 = int_to_ptr.vmem [resolvable:$true] %s47
      %53 = dma.hbm_to_vmem [thread:$0]  %s46, 4096, %s48, [#allocation6], 256, 256, 16
    $region17: #{tpu_custom_call.1} parent=1 // pred_fallthru
      _
    // Predicated region
    $region18: #{tpu_custom_call.1} parent=1 // pred_check
      _
    $region19: #{tpu_custom_call.1} parent=1 // pred_check_branch
      %55 = sbr.rel (0) target = $region21
    $region20: #{tpu_custom_call.1} parent=1 // pred_region
      _
    $region21: #{tpu_custom_call.1} parent=1 // pred_fallthru
      _
    // Predicated region
    $region22: #{tpu_custom_call.1} parent=1 // pred_check
      _
    $region23: #{tpu_custom_call.1} parent=1 // pred_check_branch
      %57 = sbr.rel (0) target = $region25
    $region24: #{tpu_custom_call.1} parent=1 // pred_region
      %59 = dma.done [#allocation3], 512
    $region25: #{tpu_custom_call.1} parent=1 // pred_fallthru
      _
    // Predicated region
    $region26: #{tpu_custom_call.1} parent=1 // pred_check
      _
    $region27: #{tpu_custom_call.1} parent=1 // pred_check_branch
      %61 = sbr.rel (0) target = $region29
    $region28: #{tpu_custom_call.1} parent=1 // pred_region
      %63 = dma.done [#allocation6], 4096
    $region29: #{tpu_custom_call.1} parent=1 // pred_fallthru
      _
    // Predicated region
    $region30: #{tpu_custom_call.1} parent=1 // pred_check
      _
    $region31: #{tpu_custom_call.1} parent=1 // pred_check_branch
      %65 = sbr.rel (0) target = $region33
    $region32: #{tpu_custom_call.1} parent=1 // pred_region
      %67 = dma.done [#allocation6], 4096
    $region33: #{tpu_custom_call.1} parent=1 // pred_fallthru
      _
    %v68 = vld [vmem:[#allocation2] sm:$0xff]
    %v69 = vld [vmem:[#allocation2 + $0x8] sm:$0xff]
    %v70 = vld [vmem:[#allocation2 + $0x10] sm:$0xff]
    %v71 = vld [vmem:[#allocation2 + $0x18] sm:$0xff]
    %v72 = vld [vmem:[#allocation5] sm:$0xff]
    %v73 = vld [vmem:[#allocation5 + $0x8] sm:$0xff]
    %v74 = vld [vmem:[#allocation5 + $0x10] sm:$0xff]
    %v75 = vld [vmem:[#allocation5 + $0x18] sm:$0xff]
    %v76 = vld [vmem:[#allocation5 + $0x20] sm:$0xff]
    %v77 = vld [vmem:[#allocation5 + $0x28] sm:$0xff]
    %v78 = vld [vmem:[#allocation5 + $0x30] sm:$0xff]
    %v79 = vld [vmem:[#allocation5 + $0x38] sm:$0xff]
    %v80 = vld [vmem:[#allocation5 + $0x40] sm:$0xff]
    %v81 = vld [vmem:[#allocation5 + $0x48] sm:$0xff]
    %v82 = vld [vmem:[#allocation5 + $0x50] sm:$0xff]
    %v83 = vld [vmem:[#allocation5 + $0x58] sm:$0xff]
    %v84 = vld [vmem:[#allocation5 + $0x60] sm:$0xff]
    %v85 = vld [vmem:[#allocation5 + $0x68] sm:$0xff]
    %v86 = vld [vmem:[#allocation5 + $0x70] sm:$0xff]
    %v87 = vld [vmem:[#allocation5 + $0x78] sm:$0xff]
    %v88 = vld [vmem:[#allocation5 + $0x80] sm:$0xff]
    %v89 = vld [vmem:[#allocation5 + $0x88] sm:$0xff]
    %v90 = vld [vmem:[#allocation5 + $0x90] sm:$0xff]
    %v91 = vld [vmem:[#allocation5 + $0x98] sm:$0xff]
    %v92 = vld [vmem:[#allocation5 + $0xa0] sm:$0xff]
    %v93 = vld [vmem:[#allocation5 + $0xa8] sm:$0xff]
    %v94 = vld [vmem:[#allocation5 + $0xb0] sm:$0xff]
    %v95 = vld [vmem:[#allocation5 + $0xb8] sm:$0xff]
    %v96 = vld [vmem:[#allocation5 + $0xc0] sm:$0xff]
    %v97 = vld [vmem:[#allocation5 + $0xc8] sm:$0xff]
    %v98 = vld [vmem:[#allocation5 + $0xd0] sm:$0xff]
    %v99 = vld [vmem:[#allocation5 + $0xd8] sm:$0xff]
    %v100 = vld [vmem:[#allocation5 + $0xe0] sm:$0xff]
    %v101 = vld [vmem:[#allocation5 + $0xe8] sm:$0xff]
    %v102 = vld [vmem:[#allocation5 + $0xf0] sm:$0xff]
    %v103 = vld [vmem:[#allocation5 + $0xf8] sm:$0xff]
    %v104 = vld [vmem:[%s2] sm:$0x1]
    %v106 = vperm.slane %v104, 0
    %108 = vmatpush.msra.mxu0 %v87
    %109 = vmatpush.msra.mxu0 %v86
    %110 = vmatpush.msra.mxu0 %v85
    %111 = vmatpush.msra.mxu0 %v84
    %112 = vmatpush.msra.mxu0 %v83
    %113 = vmatpush.msra.mxu0 %v82
    %114 = vmatpush.msra.mxu0 %v81
    %115 = vmatpush.msra.mxu0 %v80
    %116 = vmatpush.msra.mxu0 %v79
    %117 = vmatpush.msra.mxu0 %v78
    %118 = vmatpush.msra.mxu0 %v77
    %119 = vmatpush.msra.mxu0 %v76
    %120 = vmatpush.msra.mxu0 %v75
    %121 = vmatpush.msra.mxu0 %v74
    %122 = vmatpush.msra.mxu0 %v73
    %123 = vmatpush.msra.mxu0 %v72
    %124 = vmatmul.f32.gmra.mxu0 %v68
    %v125 = vpop.f32.mrf.mxu0
    %v126 = vadd.f32 %v106, %v125
    %127 = vmatmul.f32.gmra.mxu0 %v70
    %v128 = vpop.f32.mrf.mxu0
    %v129 = vadd.f32 %v106, %v128
    %130 = vdwg.mxu0
    %131 = vmatpush.msra.mxu0 %v103
    %132 = vmatpush.msra.mxu0 %v102
    %133 = vmatpush.msra.mxu0 %v101
    %134 = vmatpush.msra.mxu0 %v100
    %135 = vmatpush.msra.mxu0 %v99
    %136 = vmatpush.msra.mxu0 %v98
    %137 = vmatpush.msra.mxu0 %v97
    %138 = vmatpush.msra.mxu0 %v96
    %139 = vmatpush.msra.mxu0 %v95
    %140 = vmatpush.msra.mxu0 %v94
    %141 = vmatpush.msra.mxu0 %v93
    %142 = vmatpush.msra.mxu0 %v92
    %143 = vmatpush.msra.mxu0 %v91
    %144 = vmatpush.msra.mxu0 %v90
    %145 = vmatpush.msra.mxu0 %v89
    %146 = vmatpush.msra.mxu0 %v88
    %147 = vmatmul.f32.gmra.mxu0 %v69
    %v148 = vpop.f32.mrf.mxu0
    %v149 = vadd.f32 %v126, %v148
    %150 = vmatmul.f32.gmra.mxu0 %v71
    %v151 = vpop.f32.mrf.mxu0
    %v152 = vadd.f32 %v129, %v151
    %153 = vdwg.mxu0
    %v154 = vmul.f32 %v149, 0.2
    %v155 = vmul.f32 %v152, 0.2
    %v156 = vmax.f32 %v149, %v154
    %v157 = vmax.f32 %v152, %v155
    %v158 = vld [vmem:[#allocation7] sm:$0xff]
    %v159 = vld [vmem:[#allocation7 + $0x8] sm:$0xff]
    %v160 = vld [vmem:[#allocation7 + $0x10] sm:$0xff]
    %v161 = vld [vmem:[#allocation7 + $0x18] sm:$0xff]
    %v162 = vld [vmem:[#allocation7 + $0x20] sm:$0xff]
    %v163 = vld [vmem:[#allocation7 + $0x28] sm:$0xff]
    %v164 = vld [vmem:[#allocation7 + $0x30] sm:$0xff]
    %v165 = vld [vmem:[#allocation7 + $0x38] sm:$0xff]
    %v166 = vld [vmem:[#allocation7 + $0x40] sm:$0xff]
    %v167 = vld [vmem:[#allocation7 + $0x48] sm:$0xff]
    %v168 = vld [vmem:[#allocation7 + $0x50] sm:$0xff]
    %v169 = vld [vmem:[#allocation7 + $0x58] sm:$0xff]
    %v170 = vld [vmem:[#allocation7 + $0x60] sm:$0xff]
    %v171 = vld [vmem:[#allocation7 + $0x68] sm:$0xff]
    %v172 = vld [vmem:[#allocation7 + $0x70] sm:$0xff]
    %v173 = vld [vmem:[#allocation7 + $0x78] sm:$0xff]
    %v174 = vld [vmem:[#allocation7 + $0x80] sm:$0xff]
    %v175 = vld [vmem:[#allocation7 + $0x88] sm:$0xff]
    %v176 = vld [vmem:[#allocation7 + $0x90] sm:$0xff]
    %v177 = vld [vmem:[#allocation7 + $0x98] sm:$0xff]
    %v178 = vld [vmem:[#allocation7 + $0xa0] sm:$0xff]
    %v179 = vld [vmem:[#allocation7 + $0xa8] sm:$0xff]
    %v180 = vld [vmem:[#allocation7 + $0xb0] sm:$0xff]
    %v181 = vld [vmem:[#allocation7 + $0xb8] sm:$0xff]
    %v182 = vld [vmem:[#allocation7 + $0xc0] sm:$0xff]
    %v183 = vld [vmem:[#allocation7 + $0xc8] sm:$0xff]
    %v184 = vld [vmem:[#allocation7 + $0xd0] sm:$0xff]
    %v185 = vld [vmem:[#allocation7 + $0xd8] sm:$0xff]
    %v186 = vld [vmem:[#allocation7 + $0xe0] sm:$0xff]
    %v187 = vld [vmem:[#allocation7 + $0xe8] sm:$0xff]
    %v188 = vld [vmem:[#allocation7 + $0xf0] sm:$0xff]
    %v189 = vld [vmem:[#allocation7 + $0xf8] sm:$0xff]
    %v190 = vld [vmem:[%s4] sm:$0x3]
    %v192 = vperm.slane %v190, 0
    %v193 = vperm.slane %v190, 1
    %196 = vmatpush.msra.mxu0 %v188
    %197 = vmatpush.msra.mxu0 %v186
    %198 = vmatpush.msra.mxu0 %v184
    %199 = vmatpush.msra.mxu0 %v182
    %200 = vmatpush.msra.mxu0 %v180
    %201 = vmatpush.msra.mxu0 %v178
    %202 = vmatpush.msra.mxu0 %v176
    %203 = vmatpush.msra.mxu0 %v174
    %204 = vmatpush.msra.mxu0 %v172
    %205 = vmatpush.msra.mxu0 %v170
    %206 = vmatpush.msra.mxu0 %v168
    %207 = vmatpush.msra.mxu0 %v166
    %208 = vmatpush.msra.mxu0 %v164
    %209 = vmatpush.msra.mxu0 %v162
    %210 = vmatpush.msra.mxu0 %v160
    %211 = vmatpush.msra.mxu0 %v158
    %212 = vmatmul.f32.gmra.mxu0 %v156
    %v213 = vpop.f32.mrf.mxu0
    %v214 = vadd.f32 %v192, %v213
    %215 = vmatmul.f32.gmra.mxu0 %v157
    %v216 = vpop.f32.mrf.mxu0
    %v217 = vadd.f32 %v192, %v216
    %218 = vdwg.mxu0
    %219 = vmatpush.msra.mxu0 %v189
    %220 = vmatpush.msra.mxu0 %v187
    %221 = vmatpush.msra.mxu0 %v185
    %222 = vmatpush.msra.mxu0 %v183
    %223 = vmatpush.msra.mxu0 %v181
    %224 = vmatpush.msra.mxu0 %v179
    %225 = vmatpush.msra.mxu0 %v177
    %226 = vmatpush.msra.mxu0 %v175
    %227 = vmatpush.msra.mxu0 %v173
    %228 = vmatpush.msra.mxu0 %v171
    %229 = vmatpush.msra.mxu0 %v169
    %230 = vmatpush.msra.mxu0 %v167
    %231 = vmatpush.msra.mxu0 %v165
    %232 = vmatpush.msra.mxu0 %v163
    %233 = vmatpush.msra.mxu0 %v161
    %234 = vmatpush.msra.mxu0 %v159
    %235 = vmatmul.f32.gmra.mxu0 %v156
    %v236 = vpop.f32.mrf.mxu0
    %v237 = vadd.f32 %v193, %v236
    %238 = vmatmul.f32.gmra.mxu0 %v157
    %v239 = vpop.f32.mrf.mxu0
    %v240 = vadd.f32 %v193, %v239
    %241 = vdwg.mxu0
    %242 = vst [vmem:[#allocation8] sm:$0xff] %v214
    %243 = vst [vmem:[#allocation8 + $0x8] sm:$0xff] %v237
    %244 = vst [vmem:[#allocation8 + $0x10] sm:$0xff] %v217
    %245 = vst [vmem:[#allocation8 + $0x18] sm:$0xff] %v240
    // Predicated region
    $region34: #{tpu_custom_call.1} parent=1 // pred_check
      _
    $region35: #{tpu_custom_call.1} parent=1 // pred_check_branch
      %247 = sbr.rel (0) target = $region37
    $region36: #{tpu_custom_call.1} parent=1 // pred_region
      %249 = vsyncadd [#allocation4], 0
      %s250 = sshll.u32 [#allocation8], 4
      %s251 = int_to_ptr.vmem [resolvable:$true] %s250
      %s252 = sshll.u32 %s5, 4
      %s253 = int_to_ptr.hbm [resolvable:$true] %s252
      %258 = dma.vmem_to_hbm [thread:$0]  %s251, 512, %s253, [#allocation4], 256, 256, 16
    $region37: #{tpu_custom_call.1} parent=1 // pred_fallthru
      _
    // Predicated region
    $region38: #{tpu_custom_call.1} parent=1 // pred_check
      _
    $region39: #{tpu_custom_call.1} parent=1 // pred_check_branch
      %260 = sbr.rel (0) target = $region41
    $region40: #{tpu_custom_call.1} parent=1 // pred_region
      %262 = dma.done [#allocation4], 512
    $region41: #{tpu_custom_call.1} parent=1 // pred_fallthru
      _
    %263 = vsyncpa [#allocation3], 1
    %264 = vsyncpa [#allocation6], 1
    %265 = vsyncpa [#allocation4], 1

</llo_original>
